<compile_context>
chip_gen: v5e
topology: v5e:2x2
jax: 0.10.0
libtpu: 0.0.40
codegen_flags: <defaults>
</compile_context>

<pallas_src>
import functools

import jax
import jax.numpy as jnp
from jax.experimental import pallas as pl
from jax.experimental.pallas import tpu as pltpu


def _round_up(n: int, m: int) -> int:
    return ((n + m - 1) // m) * m


def softmax_ce_kernel(x_ref, w_ref, lab_ref, nll_ref, m_scr, l_scr, p_scr,
                      *, n_classes, n_classes_padded, compute_dtype):
    # x_ref:   (TB, K)  f32   activation tile
    # w_ref:   (TC, K)  f32   weight tile (nn.Linear layout: classes x features)
    # lab_ref: (TB, 1)  i32   labels for this batch tile
    # nll_ref: (TB, 1)  f32   per-sample NLL (written on the last class tile)
    # scratch: running max / running sum-of-exp / target logit, all (TB, 1) f32
    c = pl.program_id(1)
    num_c = pl.num_programs(1)

    @pl.when(c == 0)
    def _init():
        m_scr[...] = jnp.full_like(m_scr, -jnp.inf)
        l_scr[...] = jnp.zeros_like(l_scr)
        p_scr[...] = jnp.zeros_like(p_scr)

    x = x_ref[...].astype(compute_dtype)
    w = w_ref[...].astype(compute_dtype)
    # (TB, K) . (TC, K) contracted on K -> (TB, TC); MXU with f32 accumulation.
    logits = jax.lax.dot_general(
        x, w, dimension_numbers=(((1,), (1,)), ((), ())),
        preferred_element_type=jnp.float32)

    tb, tc = logits.shape
    col0 = c * tc
    cols = col0 + jax.lax.broadcasted_iota(jnp.int32, (tb, tc), 1)

    # Mask padded class columns so they do not perturb the log-sum-exp.
    # Static branch: skipped entirely when nClasses is already lane-aligned.
    if n_classes_padded != n_classes:
        logits = jnp.where(cols < n_classes, logits, -1e30)

    # Online log-sum-exp update across class tiles.
    m_prev = m_scr[...]
    m_new = jnp.maximum(m_prev, jnp.max(logits, axis=-1, keepdims=True))
    alpha = jnp.exp(m_prev - m_new)
    l_scr[...] = alpha * l_scr[...] + jnp.sum(jnp.exp(logits - m_new),
                                              axis=-1, keepdims=True)
    m_scr[...] = m_new

    # Accumulate the target-class logit; only the tile containing the label hits.
    labels = lab_ref[...]                                       # (TB, 1) int32
    p_scr[...] += jnp.sum(jnp.where(cols == labels, logits, 0.0),
                          axis=-1, keepdims=True)

    @pl.when(c == num_c - 1)
    def _finalize():
        lse = m_scr[...] + jnp.log(l_scr[...])
        nll_ref[...] = lse - p_scr[...]


# Keep the input + double-buffered tiles comfortably inside the scoped VMEM
# budget (v7x only has 64 MiB physical per TensorCore).
_VMEM_LIMIT_BYTES = 48 * 1024 * 1024
_TILE_BUDGET_BYTES = 36 * 1024 * 1024


def _pick_tiles(B, C, K, block_b, block_c):
    tb = min(_round_up(block_b, 8), _round_up(B, 8))
    tc = min(_round_up(block_c, 128), _round_up(C, 128))

    def tile_bytes(tb_, tc_):
        # x tile + double-buffered weight tile + logits tile + small scratch.
        return 4 * (2 * tb_ * K + 2 * tc_ * K + tb_ * tc_ + 8 * tb_)

    # Shrink the class tile first (it streams), then the batch tile.
    while tc > 128 and tile_bytes(tb, tc) > _TILE_BUDGET_BYTES:
        tc = _round_up(tc // 2, 128)
    while tb > 8 and tile_bytes(tb, tc) > _TILE_BUDGET_BYTES:
        tb = _round_up(tb // 2, 8)
    return tb, tc


def softmax_loss(x, weight, label, *, block_b=128, block_c=512,
                 compute_dtype=jnp.float32):
    """Mean cross-entropy of (x @ weight.T) against `label`.

    x:      (B, nOut) f32
    weight: (nClasses, nOut) f32 (nn.Linear layout, never transposed on host)
    label:  (B,) int
    Set compute_dtype=jnp.bfloat16 on v6e/v7x for 2x MXU throughput
    (softmax/LSE math stays in f32 via preferred_element_type).
    """
    B, nOut = x.shape
    C = weight.shape[0]

    tb, tc = _pick_tiles(B, C, nOut, block_b, block_c)
    bp = _round_up(B, tb)
    cp = _round_up(C, tc)

    if bp != B:
        x = jnp.pad(x, ((0, bp - B), (0, 0)))
        label = jnp.pad(label, (0, bp - B))
    if cp != C:
        weight = jnp.pad(weight, ((0, cp - C), (0, 0)))
    labels2d = label.astype(jnp.int32).reshape(bp, 1)

    # TODO(synk): K-tile nOut (multiples of 128) with a (tb, tc) logits
    # accumulator if nOut alone ever blows the per-tile VMEM budget.

    grid = (bp // tb, cp // tc)

    per_sample = pl.pallas_call(
        functools.partial(softmax_ce_kernel, n_classes=C, n_classes_padded=cp,
                          compute_dtype=compute_dtype),
        out_shape=jax.ShapeDtypeStruct((bp, 1), jnp.float32),
        grid_spec=pltpu.PrefetchScalarGridSpec(
            num_scalar_prefetch=0,
            grid=grid,
            in_specs=[
                pl.BlockSpec((tb, nOut), lambda b, c: (b, 0)),   # x tile
                pl.BlockSpec((tc, nOut), lambda b, c: (c, 0)),   # weight tile
                pl.BlockSpec((tb, 1), lambda b, c: (b, 0)),      # labels
            ],
            out_specs=pl.BlockSpec((tb, 1), lambda b, c: (b, 0)),
            scratch_shapes=[
                pltpu.VMEM((tb, 1), jnp.float32),   # running max m
                pltpu.VMEM((tb, 1), jnp.float32),   # running sum-of-exp l
                pltpu.VMEM((tb, 1), jnp.float32),   # gathered target logit
            ],
        ),
        compiler_params=pltpu.CompilerParams(
            dimension_semantics=("parallel", "arbitrary"),
            vmem_limit_bytes=_VMEM_LIMIT_BYTES),
    )(x, weight, labels2d)

    # Drop padded rows; the single-scalar mean lives in the wrapper because the
    # batch tiles may execute on different TensorCores.
    return jnp.sum(per_sample[:B, 0]) * (1.0 / B)


if __name__ == "__main__":
    B, nOut, nClasses = 8, 32, 16

    key = jax.random.PRNGKey(0)
    kx, kw, kl = jax.random.split(key, 3)

    x = jax.random.normal(kx, (B, nOut), dtype=jnp.float32)
    # nn.Linear default init: uniform(-1/sqrt(nOut), 1/sqrt(nOut))
    bound = 1.0 / (nOut ** 0.5)
    w = jax.random.uniform(kw, (nClasses, nOut), dtype=jnp.float32,
                           minval=-bound, maxval=bound)
    label = jax.random.randint(kl, (B,), 0, nClasses, dtype=jnp.int32)

    loss = softmax_loss(x, w, label)
    loss = jax.block_until_ready(loss)

    # Silent correctness check against a pure-JAX reference.
    logits_ref = x @ w.T
    lse_ref = jax.scipy.special.logsumexp(logits_ref, axis=-1)
    ref = jnp.mean(lse_ref - logits_ref[jnp.arange(B), label])
    assert jnp.allclose(loss, ref, atol=1e-5, rtol=1e-5), (loss, ref)

    print("KERNEL_OK")
</pallas_src>

<mosaic_0001>
module attributes {stable_mosaic.version = 11 : i64} {
  func.func @softmax_ce_kernel(%arg0: i32, %arg1: i32, %arg2: memref<8x32xf32, #tpu.memory_space<vmem>>, %arg3: memref<128x32xf32, #tpu.memory_space<vmem>>, %arg4: memref<8x1xi32, #tpu.memory_space<vmem>>, %arg5: memref<8x1xf32, #tpu.memory_space<vmem>>, %arg6: memref<8x1xf32, #tpu.memory_space<vmem>>, %arg7: memref<8x1xf32, #tpu.memory_space<vmem>>, %arg8: memref<8x1xf32, #tpu.memory_space<vmem>>) attributes {dimension_semantics = [#tpu.dimension_semantics<parallel>, #tpu.dimension_semantics<arbitrary>], iteration_bounds = array<i64: 1, 1>, scalar_prefetch = 0 : i64, scratch_operands = 3 : i64, tpu.core_type = #tpu.core_type<tc>, window_params = [{transform_indices = @transform_0, window_bounds = array<i64: 8, 32>}, {transform_indices = @transform_1, window_bounds = array<i64: 128, 32>}, {transform_indices = @transform_2, window_bounds = array<i64: 8, 1>}, {transform_indices = @transform_3, window_bounds = array<i64: 8, 1>}]} {
    %c0_i32 = arith.constant 0 : i32
    %0 = arith.cmpi eq, %arg1, %c0_i32 : i32
    %1 = arith.extui %0 : i1 to i32
    %c0_i32_0 = arith.constant 0 : i32
    %2 = arith.cmpi ne, %1, %c0_i32_0 : i32
    scf.if %2 {
      %cst_25 = arith.constant 0xFF800000 : f32
      %43 = vector.broadcast %cst_25 : f32 to vector<8x1xf32>
      %c0_26 = arith.constant 0 : index
      %c0_27 = arith.constant 0 : index
      %44 = vector.load %arg6[%c0_26, %c0_27] : memref<8x1xf32, #tpu.memory_space<vmem>>, vector<8x1xf32>
      tpu.vector_store %arg6[%c0_26, %c0_27], %43 {strides = array<i32>} : memref<8x1xf32, #tpu.memory_space<vmem>>, vector<8x1xf32>,
      %cst_28 = arith.constant 0.000000e+00 : f32
      %45 = vector.broadcast %cst_28 : f32 to vector<8x1xf32>
      %c0_29 = arith.constant 0 : index
      %c0_30 = arith.constant 0 : index
      %46 = vector.load %arg7[%c0_29, %c0_30] : memref<8x1xf32, #tpu.memory_space<vmem>>, vector<8x1xf32>
      tpu.vector_store %arg7[%c0_29, %c0_30], %45 {strides = array<i32>} : memref<8x1xf32, #tpu.memory_space<vmem>>, vector<8x1xf32>,
      %cst_31 = arith.constant 0.000000e+00 : f32
      %47 = vector.broadcast %cst_31 : f32 to vector<8x1xf32>
      %c0_32 = arith.constant 0 : index
      %c0_33 = arith.constant 0 : index
      %48 = vector.load %arg8[%c0_32, %c0_33] : memref<8x1xf32, #tpu.memory_space<vmem>>, vector<8x1xf32>
      tpu.vector_store %arg8[%c0_32, %c0_33], %47 {strides = array<i32>} : memref<8x1xf32, #tpu.memory_space<vmem>>, vector<8x1xf32>,
    } else {
    }
    %c0 = arith.constant 0 : index
    %c0_1 = arith.constant 0 : index
    %3 = vector.load %arg2[%c0, %c0_1] : memref<8x32xf32, #tpu.memory_space<vmem>>, vector<8x32xf32>
    %c0_2 = arith.constant 0 : index
    %c0_3 = arith.constant 0 : index
    %4 = vector.load %arg3[%c0_2, %c0_3] : memref<128x32xf32, #tpu.memory_space<vmem>>, vector<128x32xf32>
    %cst = arith.constant dense<0.000000e+00> : vector<8x128xf32>
    %5 = tpu.matmul %3, %4, %cst {dimension_numbers = #tpu.dot_dimension_numbers<[1], [1], [0], [0], [0, 0, 1, 0], [], []>} : vector<8x32xf32>, vector<128x32xf32>, vector<8x128xf32> -> vector<8x128xf32>
    %c128_i32 = arith.constant 128 : i32
    %6 = arith.muli %arg1, %c128_i32 : i32
    %7 = tpu.iota {dimensions = array<i32: 1>} : vector<8x128xi32>
    %8 = vector.broadcast %6 : i32 to vector<8x128xi32>
    %9 = arith.addi %8, %7 : vector<8x128xi32>
    %c16_i32 = arith.constant 16 : i32
    %10 = vector.broadcast %c16_i32 : i32 to vector<8x128xi32>
    %11 = arith.cmpi slt, %9, %10 : vector<8x128xi32>
    %cst_4 = arith.constant -1.000000e+30 : f32
    %12 = vector.broadcast %cst_4 : f32 to vector<8x128xf32>
    %13 = arith.select %11, %5, %12 : vector<8x128xi1>, vector<8x128xf32>
    %c0_5 = arith.constant 0 : index
    %c0_6 = arith.constant 0 : index
    %14 = vector.load %arg6[%c0_5, %c0_6] : memref<8x1xf32, #tpu.memory_space<vmem>>, vector<8x1xf32>
    %cst_7 = arith.constant dense<0xFF800000> : vector<8xf32>
    %15 = vector.multi_reduction <maximumf>, %13, %cst_7 [1] : vector<8x128xf32> to vector<8xf32>
    %16 = vector.shape_cast %15 : vector<8xf32> to vector<8x1xf32>
    %17 = arith.maximumf %14, %16 : vector<8x1xf32>
    %18 = arith.subf %14, %17 : vector<8x1xf32>
    %19 = math.exp %18 : vector<8x1xf32>
    %c0_8 = arith.constant 0 : index
    %c0_9 = arith.constant 0 : index
    %20 = vector.load %arg7[%c0_8, %c0_9] : memref<8x1xf32, #tpu.memory_space<vmem>>, vector<8x1xf32>
    %21 = arith.mulf %19, %20 : vector<8x1xf32>
    %22 = vector.broadcast %17 : vector<8x1xf32> to vector<8x128xf32>
    %23 = arith.subf %13, %22 : vector<8x128xf32>
    %24 = math.exp %23 : vector<8x128xf32>
    %cst_10 = arith.constant dense<0.000000e+00> : vector<8xf32>
    %25 = vector.multi_reduction <add>, %24, %cst_10 [1] : vector<8x128xf32> to vector<8xf32>
    %26 = vector.shape_cast %25 : vector<8xf32> to vector<8x1xf32>
    %27 = arith.addf %21, %26 : vector<8x1xf32>
    %c0_11 = arith.constant 0 : index
    %c0_12 = arith.constant 0 : index
    %28 = vector.load %arg7[%c0_11, %c0_12] : memref<8x1xf32, #tpu.memory_space<vmem>>, vector<8x1xf32>
    tpu.vector_store %arg7[%c0_11, %c0_12], %27 {strides = array<i32>} : memref<8x1xf32, #tpu.memory_space<vmem>>, vector<8x1xf32>,
    %c0_13 = arith.constant 0 : index
    %c0_14 = arith.constant 0 : index
    %29 = vector.load %arg6[%c0_13, %c0_14] : memref<8x1xf32, #tpu.memory_space<vmem>>, vector<8x1xf32>
    tpu.vector_store %arg6[%c0_13, %c0_14], %17 {strides = array<i32>} : memref<8x1xf32, #tpu.memory_space<vmem>>, vector<8x1xf32>,
    %c0_15 = arith.constant 0 : index
    %c0_16 = arith.constant 0 : index
    %30 = vector.load %arg4[%c0_15, %c0_16] : memref<8x1xi32, #tpu.memory_space<vmem>>, vector<8x1xi32>
    %c0_17 = arith.constant 0 : index
    %c0_18 = arith.constant 0 : index
    %31 = vector.load %arg8[%c0_17, %c0_18] : memref<8x1xf32, #tpu.memory_space<vmem>>, vector<8x1xf32>
    %32 = vector.broadcast %30 : vector<8x1xi32> to vector<8x128xi32>
    %33 = arith.cmpi eq, %9, %32 : vector<8x128xi32>
    %cst_19 = arith.constant 0.000000e+00 : f32
    %34 = vector.broadcast %cst_19 : f32 to vector<8x128xf32>
    %35 = arith.select %33, %13, %34 : vector<8x128xi1>, vector<8x128xf32>
    %cst_20 = arith.constant dense<0.000000e+00> : vector<8xf32>
    %36 = vector.multi_reduction <add>, %35, %cst_20 [1] : vector<8x128xf32> to vector<8xf32>
    %37 = vector.shape_cast %36 : vector<8xf32> to vector<8x1xf32>
    %38 = arith.addf %31, %37 : vector<8x1xf32>
    %c0_21 = arith.constant 0 : index
    %c0_22 = arith.constant 0 : index
    %39 = vector.load %arg8[%c0_21, %c0_22] : memref<8x1xf32, #tpu.memory_space<vmem>>, vector<8x1xf32>
    tpu.vector_store %arg8[%c0_21, %c0_22], %38 {strides = array<i32>} : memref<8x1xf32, #tpu.memory_space<vmem>>, vector<8x1xf32>,
    %c0_i32_23 = arith.constant 0 : i32
    %40 = arith.cmpi eq, %arg1, %c0_i32_23 : i32
    %41 = arith.extui %40 : i1 to i32
    %c0_i32_24 = arith.constant 0 : i32
    %42 = arith.cmpi ne, %41, %c0_i32_24 : i32
    scf.if %42 {
      %c0_25 = arith.constant 0 : index
      %c0_26 = arith.constant 0 : index
      %43 = vector.load %arg6[%c0_25, %c0_26] : memref<8x1xf32, #tpu.memory_space<vmem>>, vector<8x1xf32>
      %c0_27 = arith.constant 0 : index
      %c0_28 = arith.constant 0 : index
      %44 = vector.load %arg7[%c0_27, %c0_28] : memref<8x1xf32, #tpu.memory_space<vmem>>, vector<8x1xf32>
      %45 = math.log %44 : vector<8x1xf32>
      %46 = arith.addf %43, %45 : vector<8x1xf32>
      %c0_29 = arith.constant 0 : index
      %c0_30 = arith.constant 0 : index
      %47 = vector.load %arg8[%c0_29, %c0_30] : memref<8x1xf32, #tpu.memory_space<vmem>>, vector<8x1xf32>
      %48 = arith.subf %46, %47 : vector<8x1xf32>
      %c0_31 = arith.constant 0 : index
      %c0_32 = arith.constant 0 : index
      %49 = vector.load %arg5[%c0_31, %c0_32] : memref<8x1xf32, #tpu.memory_space<vmem>>, vector<8x1xf32>
      tpu.vector_store %arg5[%c0_31, %c0_32], %48 {strides = array<i32>} : memref<8x1xf32, #tpu.memory_space<vmem>>, vector<8x1xf32>,
    } else {
    }
    return
  }
  func.func @transform_0(%arg0: i32, %arg1: i32) -> (i32, i32) {
    %c0_i32 = arith.constant 0 : i32
    %c0_i32_0 = arith.constant 0 : i32
    return %arg0, %c0_i32 : i32, i32
  }
  func.func @transform_1(%arg0: i32, %arg1: i32) -> (i32, i32) {
    %c0_i32 = arith.constant 0 : i32
    %c0_i32_0 = arith.constant 0 : i32
    return %arg1, %c0_i32 : i32, i32
  }
  func.func @transform_2(%arg0: i32, %arg1: i32) -> (i32, i32) {
    %c0_i32 = arith.constant 0 : i32
    %c0_i32_0 = arith.constant 0 : i32
    return %arg0, %c0_i32 : i32, i32
  }
  func.func @transform_3(%arg0: i32, %arg1: i32) -> (i32, i32) {
    %c0_i32 = arith.constant 0 : i32
    %c0_i32_0 = arith.constant 0 : i32
    return %arg0, %c0_i32 : i32, i32
  }
}

</mosaic_0001>

<llo_original>
// kernel: tpu_custom_call.1
$region0: #{tpu_custom_call.1}
  #allocation0 [shape = 'u32[]', space=smem, size = 0x4, offset = 0x4, fixed_abs, tag = 'smem constant byte address 0x4 - core index']
  #allocation1 [shape = 'u32[72,128]{1,0:T(1,128)}', space=vmem, size = 0x9000, scoped, tag = 'internal scratch']
  #allocation2 [shape = 'f32[8,1]{1,0:T(8,128)}', space=vmem, size = 0x1000, scoped, tag = 'scratch operand']
  #allocation3 [shape = 'f32[8,1]{1,0:T(8,128)}', space=vmem, size = 0x1000, scoped, tag = 'scratch operand']
  #allocation4 [shape = 'f32[8,1]{1,0:T(8,128)}', space=vmem, size = 0x1000, scoped, tag = 'scratch operand']
  %s0 = inlined_call_operand.vmem [shape: f32[8,32], index: 0, kind: input, shape index: {}]
  %s1 = inlined_call_operand.vmem [shape: f32[128,32], index: 1, kind: input, shape index: {}]
  %s2 = inlined_call_operand.vmem [shape: s32[8,1], index: 2, kind: input, shape index: {}]
  %s3 = inlined_call_operand.vmem [shape: f32[8,1], index: 3, kind: output, shape index: {}]
  %s4 = sld [smem:[#allocation0]]
  $region30: #{tpu_custom_call.1} parent=0
    _
  %s6 = ssub.s32 1, %s4
  %s7 = scalar_select 0, %s6, %s4
  // Predicated region
  $region2: #{tpu_custom_call.1} parent=0 // pred_check
    _
  $region3: #{tpu_custom_call.1} parent=0 // pred_check_branch
    %9 = sbr.rel (0) target = $region5
  $region4: #{tpu_custom_call.1} parent=0 // pred_region
    _
  $region5: #{tpu_custom_call.1} parent=0 // pred_fallthru
    _
  // Predicated region
  $region6: #{tpu_custom_call.1} parent=0 // pred_check
    _
  $region7: #{tpu_custom_call.1} parent=0 // pred_check_branch
    %11 = sbr.rel (0) target = $region9
  $region8: #{tpu_custom_call.1} parent=0 // pred_region
    _
  $region9: #{tpu_custom_call.1} parent=0 // pred_fallthru
    _
  // Predicated region
  $region10: #{tpu_custom_call.1} parent=0 // pred_check
    _
  $region11: #{tpu_custom_call.1} parent=0 // pred_check_branch
    %13 = sbr.rel (0) target = $region13
  $region12: #{tpu_custom_call.1} parent=0 // pred_region
    _
  $region13: #{tpu_custom_call.1} parent=0 // pred_fallthru
    _
  %p14 = scmp.eq.s32.totalorder 0, 0
  // Predicated region
  $region14: #{tpu_custom_call.1} parent=0 // pred_check
    %p15 = pneg %p14
  $region15: #{tpu_custom_call.1} parent=0 // pred_check_branch
    %17 = sbr.rel (%p15) target = $region17
  $region16: #{tpu_custom_call.1} parent=0 // pred_region
    %vm18 = vcmask 7168
    %19 = vst.msk [vmem:[#allocation2] sm:$0xff] %vm18, -inf
    %20 = vst.msk [vmem:[#allocation3] sm:$0xff] %vm18, 0.0
    %21 = vst.msk [vmem:[#allocation4] sm:$0xff] %vm18, 0.0
  $region17: #{tpu_custom_call.1} parent=0 // pred_fallthru
    _
  %v22 = vld [vmem:[%s0] sm:$0xff]
  %v23 = vld [vmem:[%s1] sm:$0xff]
  %v24 = vld [vmem:[%s1 + $0x8] sm:$0xff]
  %v25 = vld [vmem:[%s1 + $0x10] sm:$0xff]
  %v26 = vld [vmem:[%s1 + $0x18] sm:$0xff]
  %v27 = vld [vmem:[%s1 + $0x20] sm:$0xff]
  %v28 = vld [vmem:[%s1 + $0x28] sm:$0xff]
  %v29 = vld [vmem:[%s1 + $0x30] sm:$0xff]
  %v30 = vld [vmem:[%s1 + $0x38] sm:$0xff]
  %v31 = vld [vmem:[%s1 + $0x40] sm:$0xff]
  %v32 = vld [vmem:[%s1 + $0x48] sm:$0xff]
  %v33 = vld [vmem:[%s1 + $0x50] sm:$0xff]
  %v34 = vld [vmem:[%s1 + $0x58] sm:$0xff]
  %v35 = vld [vmem:[%s1 + $0x60] sm:$0xff]
  %v36 = vld [vmem:[%s1 + $0x68] sm:$0xff]
  %v37 = vld [vmem:[%s1 + $0x70] sm:$0xff]
  %v38 = vld [vmem:[%s1 + $0x78] sm:$0xff]
  %vm39 = vcmask 261120
  %v41 = vsel %vm39, %v22, 0
  %v44 = vsel %vm39, %v23, 0
  %v47 = vsel %vm39, %v24, 0
  %v50 = vsel %vm39, %v25, 0
  %v53 = vsel %vm39, %v26, 0
  %v56 = vsel %vm39, %v27, 0
  %v59 = vsel %vm39, %v28, 0
  %v62 = vsel %vm39, %v29, 0
  %v65 = vsel %vm39, %v30, 0
  %v68 = vsel %vm39, %v31, 0
  %v71 = vsel %vm39, %v32, 0
  %v74 = vsel %vm39, %v33, 0
  %v77 = vsel %vm39, %v34, 0
  %v80 = vsel %vm39, %v35, 0
  %v83 = vsel %vm39, %v36, 0
  %v86 = vsel %vm39, %v37, 0
  %v89 = vsel %vm39, %v38, 0
  %91 = vmatpush.xpose.msra.mxu0 %v89
  %92 = vmatpush.xpose.msra.mxu0 %v86
  %93 = vmatpush.xpose.msra.mxu0 %v83
  %94 = vmatpush.xpose.msra.mxu0 %v80
  %95 = vmatpush.xpose.msra.mxu0 %v77
  %96 = vmatpush.xpose.msra.mxu0 %v74
  %97 = vmatpush.xpose.msra.mxu0 %v71
  %98 = vmatpush.xpose.msra.mxu0 %v68
  %99 = vmatpush.xpose.msra.mxu0 %v65
  %100 = vmatpush.xpose.msra.mxu0 %v62
  %101 = vmatpush.xpose.msra.mxu0 %v59
  %102 = vmatpush.xpose.msra.mxu0 %v56
  %103 = vmatpush.xpose.msra.mxu0 %v53
  %104 = vmatpush.xpose.msra.mxu0 %v50
  %105 = vmatpush.xpose.msra.mxu0 %v47
  %106 = vmatpush.xpose.msra.mxu0 %v44
  %107 = vmatmul.f32.gmra.mxu0 %v41
  %v108 = vpop.f32.mrf.mxu0
  %v109 = vadd.f32 0.0, %v108
  %110 = vdwg.mxu0
  %s111 = smul.u32 0, 128
  %v112 = vlaneseq
  %v113 = vand.u32 %v112, 127
  %v114 = vstv %s111
  %v115 = vadd.s32 %v114, %v113
  %vm116 = vcmp.lt.s32.totalorder %v115, 16
  %v117 = vsel %vm116, %v109, -1e+30
  %v118 = vld [vmem:[#allocation2] sm:$0xff]
  %119 = vmax.xlane.f32.xlu0 %v117
  %v120 = vpop.xlane.xlu0 %119
  %v121 = vmax.f32 %v118, %v120
  %v122 = vsub.f32 %v118, %v121
  %v123 = vmul.f32 %v122, 1.442695
  %v124 = vpow.pop %v123
  %v125 = vld [vmem:[#allocation3] sm:$0xff]
  %v126 = vmul.f32 %v124, %v125
  %128 = vset.pattern.permute.xlu0 0
  %129 = vperm.xlu0 %128, %v121
  %v130 = vpop.permute.xlu0 %129
  %v132 = vsub.f32 %v117, %v130
  %v133 = vmul.f32 %v132, 1.442695
  %v134 = vpow.pop %v133
  %135 = vadd.xlane.f32.xlu0 %v134
  %v136 = vpop.xlane.xlu0 %135
  %v137 = vadd.f32 %v126, %v136
  %vm138 = vcmask 7168
  %139 = vst.msk [vmem:[#allocation3] sm:$0xff] %vm138, %v137
  %140 = vst.msk [vmem:[#allocation2] sm:$0xff] %vm138, %v121
  %v141 = vld [vmem:[%s2] sm:$0xff]
  %v142 = vld [vmem:[#allocation4] sm:$0xff]
  %143 = vset.pattern.permute.xlu0 0
  %144 = vperm.xlu0 %143, %v141
  %v145 = vpop.permute.xlu0 %144
  %vm146 = vcmp.eq.s32.totalorder %v115, %v145
  %v147 = vsel %vm146, %v117, 0.0
  %148 = vadd.xlane.f32.xlu0 %v147
  %v149 = vpop.xlane.xlu0 %148
  %v150 = vadd.f32 %v142, %v149
  %151 = vst.msk [vmem:[#allocation4] sm:$0xff] %vm138, %v150
  // Predicated region
  $region18: #{tpu_custom_call.1} parent=0 // pred_check
    %p152 = pneg %p14
  $region19: #{tpu_custom_call.1} parent=0 // pred_check_branch
    %154 = sbr.rel (%p152) target = $region21
  $region20: #{tpu_custom_call.1} parent=0 // pred_region
    %v155 = vld [vmem:[#allocation2] sm:$0xff]
    %v156 = vld [vmem:[#allocation3] sm:$0xff]
    %v157 = vlog2.pop %v156
    %v158 = vmul.f32 %v157, 0.6931472
    %v159 = vadd.f32 %v155, %v158
    %v160 = vld [vmem:[#allocation4] sm:$0xff]
    %v161 = vsub.f32 %v159, %v160
    %162 = vst.msk [vmem:[%s3] sm:$0xff] %vm138, %v161
  $region21: #{tpu_custom_call.1} parent=0 // pred_fallthru
    _
  // Predicated region
  $region22: #{tpu_custom_call.1} parent=0 // pred_check
    _
  $region23: #{tpu_custom_call.1} parent=0 // pred_check_branch
    %164 = sbr.rel (0) target = $region25
  $region24: #{tpu_custom_call.1} parent=0 // pred_region
    _
  $region25: #{tpu_custom_call.1} parent=0 // pred_fallthru
    _
  // Predicated region
  $region26: #{tpu_custom_call.1} parent=0 // pred_check
    _
  $region27: #{tpu_custom_call.1} parent=0 // pred_check_branch
    %166 = sbr.rel (0) target = $region29
  $region28: #{tpu_custom_call.1} parent=0 // pred_region
    _
  $region29: #{tpu_custom_call.1} parent=0 // pred_fallthru
    _

</llo_original>
